<compile_context>
chip_gen: v7x
topology: tpu7x:2x2x1
jax: 0.10.0
libtpu: 0.0.40
codegen_flags: <defaults>
</compile_context>

<pallas_src>
import functools
import math

import jax
import jax.numpy as jnp
from jax import lax
from jax.experimental import pallas as pl
from jax.experimental.pallas import tpu as pltpu


def _round_up(x, m):
    return ((x + m - 1) // m) * m


def _proxy_anchor_kernel(emb_ref, lab_ref, proxt_ref, pos_ref, neg_ref,
                         pos_acc, neg_acc, *, margin, alpha, c_tile):
    b_step = pl.program_id(1)

    @pl.when(b_step == 0)
    def _():
        pos_acc[...] = jnp.zeros_like(pos_acc)
        neg_acc[...] = jnp.zeros_like(neg_acc)

    # (B_tile, D) embedding tile, L2-normalized with rsqrt (EUP slot).
    emb = emb_ref[...].astype(jnp.float32)
    sumsq = jnp.sum(emb * emb, axis=1, keepdims=True)
    emb_n = emb * lax.rsqrt(jnp.maximum(sumsq, jnp.float32(1e-24)))

    # Proxies arrive pre-normalized and pre-transposed: (D, TC).
    prox_t = proxt_ref[...].astype(jnp.float32)

    # MXU matmul in natural orientation: (B_tile, D) @ (D, TC) -> (B_tile, TC)
    cos = jnp.dot(emb_n, prox_t, preferred_element_type=jnp.float32)

    labels = lab_ref[...]                                 # (B_tile, 1) int32, -1 = pad row
    valid = (labels >= 0).astype(jnp.float32)             # (B_tile, 1)
    c_base = pl.program_id(0) * c_tile
    class_ids = c_base + lax.broadcasted_iota(jnp.int32, cos.shape, 1)
    pos_mask = (class_ids == labels).astype(jnp.float32)  # pad labels (-1) never match

    am = jnp.float32(alpha * margin)
    s = jnp.float32(alpha) * cos                          # one mul, reused twice
    # alpha*(1+|margin|)+log(B) << 88 (checked statically in the wrapper), so a
    # plain unshifted exp-sum is safe in f32 -> no per-column max / select.
    exp_pos = jnp.exp(am - s)
    exp_neg = jnp.exp(am + s)

    pos_acc[...] += jnp.sum(exp_pos * pos_mask, axis=0, keepdims=True)
    # neg weight = valid * (1 - pos_mask) == valid - pos_mask (pos_mask only on valid rows)
    neg_acc[...] += jnp.sum(exp_neg * (valid - pos_mask), axis=0, keepdims=True)

    @pl.when(b_step == pl.num_programs(1) - 1)
    def _():
        pos_ref[...] = jnp.log(1.0 + pos_acc[...])
        neg_ref[...] = jnp.log(1.0 + neg_acc[...])


def proxy_anchor_terms(embeddings, labels, proxies, *, margin, alpha):
    B, D = embeddings.shape
    C, D2 = proxies.shape
    assert D == D2, "embedding / proxy dim mismatch"

    # ---- tile sizes (lane-dense C tiles, sublane-aligned B tiles) -----------
    c_tile = 256 if C >= 256 else _round_up(max(C, 1), 128)
    c_pad = _round_up(C, c_tile)
    b_tile = 256 if B >= 256 else _round_up(max(B, 1), 8)
    b_pad = _round_up(B, b_tile)
    nc, nb = c_pad // c_tile, b_pad // b_tile

    # Static guard for the unshifted exp-sum accumulation inside the kernel.
    if float(alpha) * (1.0 + abs(float(margin))) + math.log(b_pad + 1.0) > 85.0:
        # TODO(synk): add an online-max (shifted) accumulation variant for huge alpha.
        raise ValueError("alpha/margin too large for unshifted exp-sum accumulation")

    # ---- one-time host/XLA prep: normalize proxies, transpose to (D, c_pad) --
    prox32 = proxies.astype(jnp.float32)
    prox_n = prox32 * lax.rsqrt(
        jnp.maximum(jnp.sum(prox32 * prox32, axis=1, keepdims=True), 1e-24))
    prox_t = jnp.pad(prox_n.T, ((0, 0), (0, c_pad - C)))          # (D, c_pad) f32

    emb_p = jnp.pad(embeddings, ((0, b_pad - B), (0, 0)))         # native dtype
    lab_p = jnp.pad(labels.reshape(B, 1).astype(jnp.int32),
                    ((0, b_pad - B), (0, 0)), constant_values=-1)

    # ---- explicit VMEM budget (double-buffered inputs + outs + scratch + temps)
    est = (2 * b_tile * D * jnp.dtype(emb_p.dtype).itemsize       # emb tiles
           + 2 * D * c_tile * 4                                   # proxy tiles
           + 2 * b_tile * 4                                       # label tiles
           + (2 * 2 + 2) * c_tile * 4                             # outputs + scratch
           + 8 * b_tile * c_tile * 4)                             # cos/exp temporaries
    vmem_limit = int(min(max(2 * est, 8 * 1024 * 1024), 48 * 1024 * 1024))

    kernel = functools.partial(_proxy_anchor_kernel,
                               margin=float(margin), alpha=float(alpha),
                               c_tile=c_tile)

    pos_term, neg_term = pl.pallas_call(
        kernel,
        out_shape=(jax.ShapeDtypeStruct((1, c_pad), jnp.float32),
                   jax.ShapeDtypeStruct((1, c_pad), jnp.float32)),
        grid_spec=pltpu.PrefetchScalarGridSpec(
            num_scalar_prefetch=0,
            grid=(nc, nb),
            in_specs=[
                pl.BlockSpec((b_tile, D), lambda c, b: (b, 0)),   # embeddings
                pl.BlockSpec((b_tile, 1), lambda c, b: (b, 0)),   # labels
                pl.BlockSpec((D, c_tile), lambda c, b: (0, c)),   # proxies^T (normed)
            ],
            out_specs=(
                pl.BlockSpec((1, c_tile), lambda c, b: (0, c)),
                pl.BlockSpec((1, c_tile), lambda c, b: (0, c)),
            ),
            scratch_shapes=[pltpu.VMEM((1, c_tile), jnp.float32),
                            pltpu.VMEM((1, c_tile), jnp.float32)]),
        compiler_params=pltpu.CompilerParams(
            dimension_semantics=("parallel", "arbitrary"),
            vmem_limit_bytes=vmem_limit),
    )(emb_p, lab_p, prox_t)

    return pos_term[:, :C], neg_term[:, :C]


class ProxyAnchorLoss:
    """JAX/Pallas port of the PyTorch ProxyAnchorLoss wrapper module."""

    def __init__(self, nb_classes, sz_embed, mrg=0.1, alpha=32, key=None):
        self.nb_classes = nb_classes
        self.sz_embed = sz_embed
        self.mrg = mrg
        self.alpha = alpha
        if key is None:
            key = jax.random.PRNGKey(42)
        # Deterministic stand-in for the learnable proxy matrix (C, D),
        # matching the normal init used by pytorch_metric_learning.
        self.proxies = jax.random.normal(key, (nb_classes, sz_embed),
                                         dtype=jnp.float32)

    def __call__(self, embeddings, labels):
        C = self.nb_classes
        pos_term, neg_term = proxy_anchor_terms(
            embeddings, labels, self.proxies, margin=self.mrg, alpha=self.alpha)
        # Scalar glue: number of distinct classes present in the batch, via a
        # scatter (avoids materializing a B x C one-hot).
        present = jnp.zeros((C,), jnp.float32).at[labels.astype(jnp.int32)].set(1.0)
        num_pos_proxies = jnp.maximum(jnp.sum(present), 1.0)
        loss = jnp.sum(pos_term) / num_pos_proxies + jnp.sum(neg_term) / C
        return loss


def _reference_loss(embeddings, labels, proxies, margin, alpha):
    # Pure-JAX reference of pytorch_metric_learning's ProxyAnchorLoss.
    emb_n = embeddings / jnp.maximum(
        jnp.linalg.norm(embeddings, axis=1, keepdims=True), 1e-12)
    prox_n = proxies / jnp.maximum(
        jnp.linalg.norm(proxies, axis=1, keepdims=True), 1e-12)
    cos = emb_n @ prox_n.T
    C = proxies.shape[0]
    pos_mask = jax.nn.one_hot(labels, C)
    neg_mask = 1.0 - pos_mask
    pos_l = jnp.where(pos_mask > 0, alpha * (margin - cos), -jnp.inf)
    neg_l = jnp.where(neg_mask > 0, alpha * (cos + margin), -jnp.inf)
    zeros = jnp.zeros((1, C), jnp.float32)
    pos_term = jax.nn.logsumexp(jnp.concatenate([pos_l, zeros], axis=0), axis=0)
    neg_term = jax.nn.logsumexp(jnp.concatenate([neg_l, zeros], axis=0), axis=0)
    num_pos = jnp.sum((jnp.sum(pos_mask, axis=0) > 0).astype(jnp.float32))
    return jnp.sum(pos_term) / num_pos + jnp.sum(neg_term) / C


if __name__ == "__main__":
    nb_classes, sz_embed, batch = 8, 32, 8
    key = jax.random.PRNGKey(0)
    k_emb, k_lbl, k_prox = jax.random.split(key, 3)

    embeddings = jax.random.normal(k_emb, (batch, sz_embed), dtype=jnp.float32)
    labels = jax.random.randint(k_lbl, (batch,), 0, nb_classes, dtype=jnp.int32)

    loss_mod = ProxyAnchorLoss(nb_classes, sz_embed, mrg=0.1, alpha=32, key=k_prox)

    loss = loss_mod(embeddings, labels)
    loss = jax.block_until_ready(loss)

    ref = _reference_loss(embeddings, labels, loss_mod.proxies, 0.1, 32.0)
    assert jnp.isfinite(loss), "non-finite loss"
    assert jnp.abs(loss - ref) < 1e-3 * jnp.maximum(1.0, jnp.abs(ref)), (
        f"mismatch: pallas={loss} ref={ref}")

    print("KERNEL_OK")
</pallas_src>

<mosaic_0001>
module attributes {stable_mosaic.version = 11 : i64} {
  func.func @_proxy_anchor_kernel(%arg0: i32, %arg1: i32, %arg2: memref<8x32xf32, #tpu.memory_space<vmem>>, %arg3: memref<8x1xi32, #tpu.memory_space<vmem>>, %arg4: memref<32x128xf32, #tpu.memory_space<vmem>>, %arg5: memref<1x128xf32, #tpu.memory_space<vmem>>, %arg6: memref<1x128xf32, #tpu.memory_space<vmem>>, %arg7: memref<1x128xf32, #tpu.memory_space<vmem>>, %arg8: memref<1x128xf32, #tpu.memory_space<vmem>>) attributes {dimension_semantics = [#tpu.dimension_semantics<parallel>, #tpu.dimension_semantics<arbitrary>], iteration_bounds = array<i64: 1, 1>, scalar_prefetch = 0 : i64, scratch_operands = 2 : i64, tpu.core_type = #tpu.core_type<tc>, window_params = [{transform_indices = @transform_0, window_bounds = array<i64: 8, 32>}, {transform_indices = @transform_1, window_bounds = array<i64: 8, 1>}, {transform_indices = @transform_2, window_bounds = array<i64: 32, 128>}, {transform_indices = @transform_3, window_bounds = array<i64: 1, 128>}, {transform_indices = @transform_4, window_bounds = array<i64: 1, 128>}]} {
    %c0_i32 = arith.constant 0 : i32
    %0 = arith.cmpi eq, %arg1, %c0_i32 : i32
    %1 = arith.extui %0 : i1 to i32
    %c0_i32_0 = arith.constant 0 : i32
    %2 = arith.cmpi ne, %1, %c0_i32_0 : i32
    scf.if %2 {
      %cst_24 = arith.constant 0.000000e+00 : f32
      %52 = vector.broadcast %cst_24 : f32 to vector<1x128xf32>
      %c0_25 = arith.constant 0 : index
      %c0_26 = arith.constant 0 : index
      %53 = vector.load %arg7[%c0_25, %c0_26] : memref<1x128xf32, #tpu.memory_space<vmem>>, vector<1x128xf32>
      tpu.vector_store %arg7[%c0_25, %c0_26], %52 {strides = array<i32>} : memref<1x128xf32, #tpu.memory_space<vmem>>, vector<1x128xf32>,
      %cst_27 = arith.constant 0.000000e+00 : f32
      %54 = vector.broadcast %cst_27 : f32 to vector<1x128xf32>
      %c0_28 = arith.constant 0 : index
      %c0_29 = arith.constant 0 : index
      %55 = vector.load %arg8[%c0_28, %c0_29] : memref<1x128xf32, #tpu.memory_space<vmem>>, vector<1x128xf32>
      tpu.vector_store %arg8[%c0_28, %c0_29], %54 {strides = array<i32>} : memref<1x128xf32, #tpu.memory_space<vmem>>, vector<1x128xf32>,
    } else {
    }
    %c0 = arith.constant 0 : index
    %c0_1 = arith.constant 0 : index
    %3 = vector.load %arg2[%c0, %c0_1] : memref<8x32xf32, #tpu.memory_space<vmem>>, vector<8x32xf32>
    %4 = arith.mulf %3, %3 : vector<8x32xf32>
    %cst = arith.constant dense<0.000000e+00> : vector<8xf32>
    %5 = vector.multi_reduction <add>, %4, %cst [1] : vector<8x32xf32> to vector<8xf32>
    %6 = vector.shape_cast %5 : vector<8xf32> to vector<8x1xf32>
    %cst_2 = arith.constant 1.000000e-24 : f32
    %7 = vector.broadcast %cst_2 : f32 to vector<8x1xf32>
    %8 = arith.maximumf %6, %7 : vector<8x1xf32>
    %9 = math.rsqrt %8 : vector<8x1xf32>
    %10 = vector.broadcast %9 : vector<8x1xf32> to vector<8x32xf32>
    %11 = arith.mulf %3, %10 : vector<8x32xf32>
    %c0_3 = arith.constant 0 : index
    %c0_4 = arith.constant 0 : index
    %12 = vector.load %arg4[%c0_3, %c0_4] : memref<32x128xf32, #tpu.memory_space<vmem>>, vector<32x128xf32>
    %cst_5 = arith.constant dense<0.000000e+00> : vector<8x128xf32>
    %13 = tpu.matmul %11, %12, %cst_5 {dimension_numbers = #tpu.dot_dimension_numbers<[1], [0], [0], [1], [0, 0, 1, 1], [], []>} : vector<8x32xf32>, vector<32x128xf32>, vector<8x128xf32> -> vector<8x128xf32>
    %c0_6 = arith.constant 0 : index
    %c0_7 = arith.constant 0 : index
    %14 = vector.load %arg3[%c0_6, %c0_7] : memref<8x1xi32, #tpu.memory_space<vmem>>, vector<8x1xi32>
    %c0_i32_8 = arith.constant 0 : i32
    %15 = vector.broadcast %c0_i32_8 : i32 to vector<8x1xi32>
    %16 = arith.cmpi sge, %14, %15 : vector<8x1xi32>
    %17 = arith.extui %16 : vector<8x1xi1> to vector<8x1xi32>
    %18 = arith.sitofp %17 : vector<8x1xi32> to vector<8x1xf32>
    %c128_i32 = arith.constant 128 : i32
    %19 = arith.muli %arg0, %c128_i32 : i32
    %20 = tpu.iota {dimensions = array<i32: 1>} : vector<8x128xi32>
    %21 = vector.broadcast %19 : i32 to vector<8x128xi32>
    %22 = arith.addi %21, %20 : vector<8x128xi32>
    %23 = vector.broadcast %14 : vector<8x1xi32> to vector<8x128xi32>
    %24 = arith.cmpi eq, %22, %23 : vector<8x128xi32>
    %25 = arith.extui %24 : vector<8x128xi1> to vector<8x128xi32>
    %26 = arith.sitofp %25 : vector<8x128xi32> to vector<8x128xf32>
    %cst_9 = arith.constant 3.200000e+01 : f32
    %27 = vector.broadcast %cst_9 : f32 to vector<8x128xf32>
    %28 = arith.mulf %27, %13 : vector<8x128xf32>
    %cst_10 = arith.constant 3.200000e+00 : f32
    %29 = vector.broadcast %cst_10 : f32 to vector<8x128xf32>
    %30 = arith.subf %29, %28 : vector<8x128xf32>
    %31 = math.exp %30 : vector<8x128xf32>
    %cst_11 = arith.constant 3.200000e+00 : f32
    %32 = vector.broadcast %cst_11 : f32 to vector<8x128xf32>
    %33 = arith.addf %32, %28 : vector<8x128xf32>
    %34 = math.exp %33 : vector<8x128xf32>
    %c0_12 = arith.constant 0 : index
    %c0_13 = arith.constant 0 : index
    %35 = vector.load %arg7[%c0_12, %c0_13] : memref<1x128xf32, #tpu.memory_space<vmem>>, vector<1x128xf32>
    %36 = arith.mulf %31, %26 : vector<8x128xf32>
    %cst_14 = arith.constant dense<0.000000e+00> : vector<128xf32>
    %37 = vector.multi_reduction <add>, %36, %cst_14 [0] : vector<8x128xf32> to vector<128xf32>
    %38 = vector.shape_cast %37 : vector<128xf32> to vector<1x128xf32>
    %39 = arith.addf %35, %38 : vector<1x128xf32>
    %c0_15 = arith.constant 0 : index
    %c0_16 = arith.constant 0 : index
    %40 = vector.load %arg7[%c0_15, %c0_16] : memref<1x128xf32, #tpu.memory_space<vmem>>, vector<1x128xf32>
    tpu.vector_store %arg7[%c0_15, %c0_16], %39 {strides = array<i32>} : memref<1x128xf32, #tpu.memory_space<vmem>>, vector<1x128xf32>,
    %c0_17 = arith.constant 0 : index
    %c0_18 = arith.constant 0 : index
    %41 = vector.load %arg8[%c0_17, %c0_18] : memref<1x128xf32, #tpu.memory_space<vmem>>, vector<1x128xf32>
    %42 = vector.broadcast %18 : vector<8x1xf32> to vector<8x128xf32>
    %43 = arith.subf %42, %26 : vector<8x128xf32>
    %44 = arith.mulf %34, %43 : vector<8x128xf32>
    %cst_19 = arith.constant dense<0.000000e+00> : vector<128xf32>
    %45 = vector.multi_reduction <add>, %44, %cst_19 [0] : vector<8x128xf32> to vector<128xf32>
    %46 = vector.shape_cast %45 : vector<128xf32> to vector<1x128xf32>
    %47 = arith.addf %41, %46 : vector<1x128xf32>
    %c0_20 = arith.constant 0 : index
    %c0_21 = arith.constant 0 : index
    %48 = vector.load %arg8[%c0_20, %c0_21] : memref<1x128xf32, #tpu.memory_space<vmem>>, vector<1x128xf32>
    tpu.vector_store %arg8[%c0_20, %c0_21], %47 {strides = array<i32>} : memref<1x128xf32, #tpu.memory_space<vmem>>, vector<1x128xf32>,
    %c0_i32_22 = arith.constant 0 : i32
    %49 = arith.cmpi eq, %arg1, %c0_i32_22 : i32
    %50 = arith.extui %49 : i1 to i32
    %c0_i32_23 = arith.constant 0 : i32
    %51 = arith.cmpi ne, %50, %c0_i32_23 : i32
    scf.if %51 {
      %c0_24 = arith.constant 0 : index
      %c0_25 = arith.constant 0 : index
      %52 = vector.load %arg7[%c0_24, %c0_25] : memref<1x128xf32, #tpu.memory_space<vmem>>, vector<1x128xf32>
      %cst_26 = arith.constant 1.000000e+00 : f32
      %53 = vector.broadcast %cst_26 : f32 to vector<1x128xf32>
      %54 = arith.addf %53, %52 : vector<1x128xf32>
      %55 = math.log %54 : vector<1x128xf32>
      %c0_27 = arith.constant 0 : index
      %c0_28 = arith.constant 0 : index
      %56 = vector.load %arg5[%c0_27, %c0_28] : memref<1x128xf32, #tpu.memory_space<vmem>>, vector<1x128xf32>
      tpu.vector_store %arg5[%c0_27, %c0_28], %55 {strides = array<i32>} : memref<1x128xf32, #tpu.memory_space<vmem>>, vector<1x128xf32>,
      %c0_29 = arith.constant 0 : index
      %c0_30 = arith.constant 0 : index
      %57 = vector.load %arg8[%c0_29, %c0_30] : memref<1x128xf32, #tpu.memory_space<vmem>>, vector<1x128xf32>
      %cst_31 = arith.constant 1.000000e+00 : f32
      %58 = vector.broadcast %cst_31 : f32 to vector<1x128xf32>
      %59 = arith.addf %58, %57 : vector<1x128xf32>
      %60 = math.log %59 : vector<1x128xf32>
      %c0_32 = arith.constant 0 : index
      %c0_33 = arith.constant 0 : index
      %61 = vector.load %arg6[%c0_32, %c0_33] : memref<1x128xf32, #tpu.memory_space<vmem>>, vector<1x128xf32>
      tpu.vector_store %arg6[%c0_32, %c0_33], %60 {strides = array<i32>} : memref<1x128xf32, #tpu.memory_space<vmem>>, vector<1x128xf32>,
    } else {
    }
    return
  }
  func.func @transform_0(%arg0: i32, %arg1: i32) -> (i32, i32) {
    %c0_i32 = arith.constant 0 : i32
    %c0_i32_0 = arith.constant 0 : i32
    return %arg1, %c0_i32 : i32, i32
  }
  func.func @transform_1(%arg0: i32, %arg1: i32) -> (i32, i32) {
    %c0_i32 = arith.constant 0 : i32
    %c0_i32_0 = arith.constant 0 : i32
    return %arg1, %c0_i32 : i32, i32
  }
  func.func @transform_2(%arg0: i32, %arg1: i32) -> (i32, i32) {
    %c0_i32 = arith.constant 0 : i32
    %c0_i32_0 = arith.constant 0 : i32
    return %c0_i32, %arg0 : i32, i32
  }
  func.func @transform_3(%arg0: i32, %arg1: i32) -> (i32, i32) {
    %c0_i32 = arith.constant 0 : i32
    %c0_i32_0 = arith.constant 0 : i32
    return %c0_i32, %arg0 : i32, i32
  }
  func.func @transform_4(%arg0: i32, %arg1: i32) -> (i32, i32) {
    %c0_i32 = arith.constant 0 : i32
    %c0_i32_0 = arith.constant 0 : i32
    return %c0_i32, %arg0 : i32, i32
  }
}

</mosaic_0001>

<llo_original>
// kernel: tpu_custom_call.1
$region0: #{tpu_custom_call.1}
  #allocation0 [shape = 'u32[]', space=smem, size = 0x4, offset = 0x4, fixed_abs, tag = 'smem constant byte address 0x4 - core index']
  #allocation1 [shape = 'u32[144,128]{1,0:T(1,128)}', space=vmem, size = 0x12000, scoped, tag = 'internal scratch']
  #allocation2 [shape = 'f32[1,128]{1,0:T(1,128)}', space=vmem, size = 0x200, scoped, tag = 'scratch operand']
  #allocation3 [shape = 'f32[1,128]{1,0:T(1,128)}', space=vmem, size = 0x200, scoped, tag = 'scratch operand']
  %s0 = inlined_call_operand.vmem [shape: f32[8,32], index: 0, kind: input, shape index: {}]
  %s1 = inlined_call_operand.vmem [shape: s32[8,1], index: 1, kind: input, shape index: {}]
  %s2 = inlined_call_operand.hbm [shape: f32[32,128], index: 2, kind: input, shape index: {}]
  %s3 = inlined_call_operand.hbm [shape: f32[1,128], index: 3, kind: output, shape index: {0}]
  %s4 = inlined_call_operand.hbm [shape: f32[1,128], index: 4, kind: output, shape index: {1}]
  %5 = xla_tuple %s3, %s4
  %s6 = sld [smem:[#allocation0]]
  $region42: #{tpu_custom_call.1} parent=0
    _
  %s8 = ssub.s32 1, %s6
  %s9 = scalar_select 0, %s8, %s6
  $region1: #{tpu_custom_call.1} parent=0
    #allocation4 [shape = 'u8[16384]{0}', space=vmem, size = 0x4000, scoped, tag = 'input window, operand 2, single buffered']
    #allocation5 [shape = 's32[1]{0}', space=sflag, size = 0x4, scoped, tag = 'scoped memory for tpu_custom_call.1']
    #allocation6 [shape = 's32[1]{0}', space=sflag, size = 0x4, scoped, tag = 'scoped memory for tpu_custom_call.1']
    #allocation7 [shape = 'u8[512]{0}', space=vmem, size = 0x400, scoped, tag = 'output window, operand 0, single buffered']
    #allocation8 [shape = 'u8[512]{0}', space=vmem, size = 0x400, scoped, tag = 'output window, operand 1, single buffered']
    #allocation9 [shape = 's32[1]{0}', space=sflag, size = 0x4, scoped, tag = 'scoped memory for tpu_custom_call.1']
    %10 = vsyncpa [#allocation5], 0
    %11 = vsyncpa [#allocation6], 0
    %12 = vsyncpa [#allocation9], 0
    // Predicated region
    $region2: #{tpu_custom_call.1} parent=1 // pred_check
      _
    $region3: #{tpu_custom_call.1} parent=1 // pred_check_branch
      %14 = sbr.rel (0) target = $region5
    $region4: #{tpu_custom_call.1} parent=1 // pred_region
      _
    $region5: #{tpu_custom_call.1} parent=1 // pred_fallthru
      _
    // Predicated region
    $region6: #{tpu_custom_call.1} parent=1 // pred_check
      _
    $region7: #{tpu_custom_call.1} parent=1 // pred_check_branch
      %16 = sbr.rel (0) target = $region9
    $region8: #{tpu_custom_call.1} parent=1 // pred_region
      _
    $region9: #{tpu_custom_call.1} parent=1 // pred_fallthru
      _
    // Predicated region
    $region10: #{tpu_custom_call.1} parent=1 // pred_check
      _
    $region11: #{tpu_custom_call.1} parent=1 // pred_check_branch
      %18 = sbr.rel (0) target = $region13
    $region12: #{tpu_custom_call.1} parent=1 // pred_region
      %s20 = ssub.s32 512, 512
      %21 = vsyncadd [#allocation5], %s20
      %s22 = sshll.u32 [#allocation4], 4
      %s23 = int_to_ptr.vmem [resolvable:$true] %s22
      %28 = dma.hbm_to_vmem [thread:$0]  %s2, 512, %s23, [#allocation5], 128, 128, 8
    $region13: #{tpu_custom_call.1} parent=1 // pred_fallthru
      _
    // Predicated region
    $region14: #{tpu_custom_call.1} parent=1 // pred_check
      _
    $region15: #{tpu_custom_call.1} parent=1 // pred_check_branch
      %30 = sbr.rel (0) target = $region17
    $region16: #{tpu_custom_call.1} parent=1 // pred_region
      %31 = dma.done [#allocation5], 512
    $region17: #{tpu_custom_call.1} parent=1 // pred_fallthru
      _
    %p32 = scmp.eq.s32.totalorder 0, 0
    // Predicated region
    $region18: #{tpu_custom_call.1} parent=1 // pred_check
      %p33 = pneg %p32
    $region19: #{tpu_custom_call.1} parent=1 // pred_check_branch
      %35 = sbr.rel (%p33) target = $region21
    $region20: #{tpu_custom_call.1} parent=1 // pred_region
      %36 = vst [vmem:[#allocation2] sm:$0x1] 0.0
      %37 = vst [vmem:[#allocation3] sm:$0x1] 0.0
    $region21: #{tpu_custom_call.1} parent=1 // pred_fallthru
      _
    %v38 = vld [vmem:[%s0] sm:$0xff]
    %v39 = vmul.f32 %v38, %v38
    %vm40 = vcmask 261120
    %v41 = vsel %vm40, %v39, 0.0
    %42 = vadd.xlane.f32.xlu0 %v41
    %v43 = vpop.xlane.xlu0 %42
    %v44 = vmax.f32 %v43, 1e-24
    %v45 = vrsqrt.pop %v44
    %v46 = vmul.f32 %v38, %v45
    %v47 = vld [vmem:[#allocation4] sm:$0xff]
    %v48 = vld [vmem:[#allocation4 + $0x8] sm:$0xff]
    %v49 = vld [vmem:[#allocation4 + $0x10] sm:$0xff]
    %v50 = vld [vmem:[#allocation4 + $0x18] sm:$0xff]
    %v52 = vsel %vm40, %v46, 0
    %54 = vmatprep.subr.mxu0 0.0
    %55 = vmatpush1.msra.mxu0 %v47
    %56 = vmatprep.subr.mxu0 0.0
    %57 = vmatpush1.msra.mxu0 %v48
    %58 = vmatprep.subr.mxu0 0.0
    %59 = vmatpush1.msra.mxu0 %v49
    %60 = vmatprep.subr.mxu0 0.0
    %61 = vmatpush1.msra.mxu0 %v50
    %62 = vmatprep.subr.mxu0 0.0
    %63 = vmatpush1.msra.mxu0 0.0
    %64 = vmatprep.subr.mxu0 0.0
    %65 = vmatpush1.msra.mxu0 0.0
    %66 = vmatprep.subr.mxu0 0.0
    %67 = vmatpush1.msra.mxu0 0.0
    %68 = vmatprep.subr.mxu0 0.0
    %69 = vmatpush1.msra.mxu0 0.0
    %70 = vmatprep.subr.mxu0 0.0
    %71 = vmatpush1.msra.mxu0 0.0
    %72 = vmatprep.subr.mxu0 0.0
    %73 = vmatpush1.msra.mxu0 0.0
    %74 = vmatprep.subr.mxu0 0.0
    %75 = vmatpush1.msra.mxu0 0.0
    %76 = vmatprep.subr.mxu0 0.0
    %77 = vmatpush1.msra.mxu0 0.0
    %78 = vmatprep.subr.mxu0 0.0
    %79 = vmatpush1.msra.mxu0 0.0
    %80 = vmatprep.subr.mxu0 0.0
    %81 = vmatpush1.msra.mxu0 0.0
    %82 = vmatprep.subr.mxu0 0.0
    %83 = vmatpush1.msra.mxu0 0.0
    %84 = vmatprep.subr.mxu0 0.0
    %85 = vmatpush1.msra.mxu0 0.0
    %86 = vmatprep.subr.mxu0 0.0
    %87 = vmatpush1.msra.mxu0 0.0
    %88 = vmatprep.subr.mxu0 0.0
    %89 = vmatpush1.msra.mxu0 0.0
    %90 = vmatprep.subr.mxu0 0.0
    %91 = vmatpush1.msra.mxu0 0.0
    %92 = vmatprep.subr.mxu0 0.0
    %93 = vmatpush1.msra.mxu0 0.0
    %94 = vmatprep.subr.mxu0 0.0
    %95 = vmatpush1.msra.mxu0 0.0
    %96 = vmatprep.subr.mxu0 0.0
    %97 = vmatpush1.msra.mxu0 0.0
    %98 = vmatprep.subr.mxu0 0.0
    %99 = vmatpush1.msra.mxu0 0.0
    %100 = vmatprep.subr.mxu0 0.0
    %101 = vmatpush1.msra.mxu0 0.0
    %102 = vmatprep.subr.mxu0 0.0
    %103 = vmatpush1.msra.mxu0 0.0
    %104 = vmatprep.subr.mxu0 0.0
    %105 = vmatpush1.msra.mxu0 0.0
    %106 = vmatprep.subr.mxu0 0.0
    %107 = vmatpush1.msra.mxu0 0.0
    %108 = vmatprep.subr.mxu0 0.0
    %109 = vmatpush1.msra.mxu0 0.0
    %110 = vmatprep.subr.mxu0 0.0
    %111 = vmatpush1.msra.mxu0 0.0
    %112 = vmatprep.subr.mxu0 0.0
    %113 = vmatpush1.msra.mxu0 0.0
    %114 = vmatprep.subr.mxu0 0.0
    %115 = vmatpush1.msra.mxu0 0.0
    %116 = vmatprep.subr.mxu0 0.0
    %117 = vmatpush1.msra.mxu0 0.0
    %118 = vmatprep.mubr.f32.mxu0 0.0
    %119 = vmatmul.mubr.f32.gmra.mrb[0].mxu0 %v52
    %v120 = vpop.f32.mrb[0].mxu0
    %v121 = vadd.f32 0.0, %v120
    %v122 = vpop.f32.mrb[0].mxu0
    %123 = vdwg.mxu0
    %v124 = vld [vmem:[%s1] sm:$0xff]
    %vm125 = vcmp.ge.s32.totalorder %v124, 0
    %v126 = vsel %vm125, 1, 0
    %v127 = vcvt.s32.f32 %v126
    %s128 = smul.u32 0, 128
    %v129 = vlaneseq
    %v130 = vand.u32 %v129, 127
    %v131 = vstv %s128
    %v132 = vadd.s32 %v131, %v130
    %133 = vset.pattern.permute.xlu0 0
    %134 = vperm.xlu0 %133, %v124
    %v135 = vpop.permute.xlu0 %134
    %vm136 = vcmp.eq.s32.totalorder %v132, %v135
    %v137 = vsel %vm136, 1, 0
    %v138 = vcvt.s32.f32 %v137
    %v139 = vmul.f32 %v121, 32.0
    %v140 = vsub.f32 3.2, %v139
    %v141 = vmul.f32 %v140, 1.442695
    %v142 = vpow.pop %v141
    %v143 = vadd.f32 %v139, 3.2
    %v144 = vmul.f32 %v143, 1.442695
    %v145 = vpow.pop %v144
    %v146 = vld [vmem:[#allocation2] sm:$0x1]
    %v147 = vmul.f32 %v142, %v138
    %v148 = vrot.slane %v147, 4
    %v149 = vadd.f32 %v147, %v148
    %v150 = vrot.slane %v149, 2
    %v151 = vadd.f32 %v149, %v150
    %v152 = vrot.slane %v151, 1
    %v153 = vadd.f32 %v151, %v152
    %v154 = vadd.f32 %v146, %v153
    %155 = vst [vmem:[#allocation2] sm:$0x1] %v154
    %v156 = vld [vmem:[#allocation3] sm:$0x1]
    %158 = vset.pattern.permute.xlu0 0
    %159 = vperm.xlu0 %158, %v127
    %v160 = vpop.permute.xlu0 %159
    %v162 = vsub.f32 %v160, %v138
    %v163 = vmul.f32 %v145, %v162
    %v164 = vrot.slane %v163, 4
    %v165 = vadd.f32 %v163, %v164
    %v166 = vrot.slane %v165, 2
    %v167 = vadd.f32 %v165, %v166
    %v168 = vrot.slane %v167, 1
    %v169 = vadd.f32 %v167, %v168
    %v170 = vadd.f32 %v156, %v169
    %171 = vst [vmem:[#allocation3] sm:$0x1] %v170
    // Predicated region
    $region22: #{tpu_custom_call.1} parent=1 // pred_check
      %p172 = pneg %p32
    $region23: #{tpu_custom_call.1} parent=1 // pred_check_branch
      %174 = sbr.rel (%p172) target = $region25
    $region24: #{tpu_custom_call.1} parent=1 // pred_region
      %v175 = vld [vmem:[#allocation2] sm:$0x1]
      %v176 = vadd.f32 %v175, 1.0
      %v177 = vlog2.pop %v176
      %v178 = vmul.f32 %v177, 0.6931472
      %179 = vst [vmem:[#allocation7] sm:$0x1] %v178
      %v180 = vld [vmem:[#allocation3] sm:$0x1]
      %v181 = vadd.f32 %v180, 1.0
      %v182 = vlog2.pop %v181
      %v183 = vmul.f32 %v182, 0.6931472
      %184 = vst [vmem:[#allocation8] sm:$0x1] %v183
    $region25: #{tpu_custom_call.1} parent=1 // pred_fallthru
      _
    // Predicated region
    $region26: #{tpu_custom_call.1} parent=1 // pred_check
      _
    $region27: #{tpu_custom_call.1} parent=1 // pred_check_branch
      %186 = sbr.rel (0) target = $region29
    $region28: #{tpu_custom_call.1} parent=1 // pred_region
      %s188 = ssub.s32 16, 16
      %189 = vsyncadd [#allocation6], %s188
      %s191 = sshll.u32 [#allocation7], 4
      %s192 = int_to_ptr.vmem [resolvable:$true] %s191
      %194 = dma.vmem_to_hbm [thread:$0]  %s192, 16, %s3, [#allocation6]
    $region29: #{tpu_custom_call.1} parent=1 // pred_fallthru
      _
    // Predicated region
    $region30: #{tpu_custom_call.1} parent=1 // pred_check
      _
    $region31: #{tpu_custom_call.1} parent=1 // pred_check_branch
      %196 = sbr.rel (0) target = $region33
    $region32: #{tpu_custom_call.1} parent=1 // pred_region
      %s198 = ssub.s32 16, 16
      %199 = vsyncadd [#allocation9], %s198
      %s201 = sshll.u32 [#allocation8], 4
      %s202 = int_to_ptr.vmem [resolvable:$true] %s201
      %204 = dma.vmem_to_hbm [thread:$0]  %s202, 16, %s4, [#allocation9]
    $region33: #{tpu_custom_call.1} parent=1 // pred_fallthru
      _
    // Predicated region
    $region34: #{tpu_custom_call.1} parent=1 // pred_check
      _
    $region35: #{tpu_custom_call.1} parent=1 // pred_check_branch
      %206 = sbr.rel (0) target = $region37
    $region36: #{tpu_custom_call.1} parent=1 // pred_region
      %207 = dma.done [#allocation6], 16
    $region37: #{tpu_custom_call.1} parent=1 // pred_fallthru
      _
    // Predicated region
    $region38: #{tpu_custom_call.1} parent=1 // pred_check
      _
    $region39: #{tpu_custom_call.1} parent=1 // pred_check_branch
      %209 = sbr.rel (0) target = $region41
    $region40: #{tpu_custom_call.1} parent=1 // pred_region
      %210 = dma.done [#allocation9], 16
    $region41: #{tpu_custom_call.1} parent=1 // pred_fallthru
      _
    %211 = vsyncpa [#allocation5], 1
    %212 = vsyncpa [#allocation6], 1
    %213 = vsyncpa [#allocation9], 1

</llo_original>
